<compile_context>
chip_gen: v6e
topology: v6e:2x2x1
jax: 0.10.0
libtpu: 0.0.40
codegen_flags: <defaults>
</compile_context>

<pallas_src>
import math
import jax
import jax.numpy as jnp
from jax import lax
from jax.experimental import pallas as pl
from jax.experimental.pallas import tpu as pltpu


def _attention_head_kernel(xq_ref, xkv_ref, wq_ref, bq_ref, wk_ref, bk_ref,
                           wv_ref, bv_ref, out_ref, probs_ref):
    # xq_ref: (1, tq, H) query-side rows; xkv_ref: (1, S, H) full sequence;
    # w*_ref: (H, D); b*_ref: (1, D)
    d = wq_ref.shape[1]
    scale = 1.0 / math.sqrt(d)

    # bf16 inputs for the MXU; accumulate in f32.
    xq = xq_ref[0].astype(jnp.bfloat16)       # (tq, H)
    xkv = xkv_ref[0].astype(jnp.bfloat16)     # (S, H)
    wq = wq_ref[...].astype(jnp.bfloat16)
    wk = wk_ref[...].astype(jnp.bfloat16)
    wv = wv_ref[...].astype(jnp.bfloat16)

    q = jnp.dot(xq, wq, preferred_element_type=jnp.float32) + bq_ref[0]   # (tq, D) f32
    k = jnp.dot(xkv, wk, preferred_element_type=jnp.float32) + bk_ref[0]  # (S, D)  f32
    v = jnp.dot(xkv, wv, preferred_element_type=jnp.float32) + bv_ref[0]  # (S, D)  f32

    # Fold the 1/sqrt(d) scale into q (touches tq*D elements, not tq*S scores).
    q = q * scale

    # Q @ K^T with a last-dim contraction (no explicit transpose of k).
    scores = lax.dot_general(
        q.astype(jnp.bfloat16), k.astype(jnp.bfloat16),
        dimension_numbers=(((1,), (1,)), ((), ())),
        preferred_element_type=jnp.float32)                               # (tq, S) f32

    # Numerically stable softmax in f32; reciprocal goes to the EUP slot.
    m = jnp.max(scores, axis=-1, keepdims=True)
    e = jnp.exp(scores - m)
    denom = jnp.sum(e, axis=-1, keepdims=True)
    probs = e * pl.reciprocal(denom, approx=True)                         # (tq, S) f32

    # TODO(synk): dropout is identity here (inference / model.eval()); training
    # dropout would need pltpu.prng_seed + pltpu.prng_random_bits masking.
    attn = jnp.dot(probs.astype(jnp.bfloat16), v.astype(jnp.bfloat16),
                   preferred_element_type=jnp.float32)                    # (tq, D) f32

    out_ref[0] = attn.astype(out_ref.dtype)
    probs_ref[0] = probs.astype(probs_ref.dtype)


def attention_head(x, wq, bq, wk, bk, wv, bv, *, max_q_tile=256):
    """x: (B, S, H); w*: (H, D); b*: (D,). Returns (out (B,S,D), probs (B,S,S))."""
    B, S, H = x.shape
    D = wq.shape[1]

    # Query tiling bounds VMEM at O(tq * S) per step instead of O(S * S).
    tq = S if S <= max_q_tile else max_q_tile
    assert S % tq == 0, "sequence length must be divisible by the query tile"
    n_q = S // tq
    # TODO(synk): for very large S also tile the KV axis (flash-style online
    # softmax needs a second normalization pass because probs is an output).

    # Biases as (1, D) so they are >= 2-D for TPU layout.
    bq2 = bq.reshape(1, D)
    bk2 = bk.reshape(1, D)
    bv2 = bv.reshape(1, D)

    w_spec = pl.BlockSpec((H, D), lambda b, qi: (0, 0))
    b_spec = pl.BlockSpec((1, D), lambda b, qi: (0, 0))

    out, probs = pl.pallas_call(
        _attention_head_kernel,
        out_shape=(
            jax.ShapeDtypeStruct((B, S, D), x.dtype),
            jax.ShapeDtypeStruct((B, S, S), x.dtype),
        ),
        grid_spec=pltpu.PrefetchScalarGridSpec(
            num_scalar_prefetch=0,
            grid=(B, n_q),
            in_specs=[
                pl.BlockSpec((1, tq, H), lambda b, qi: (b, qi, 0)),  # x rows for Q tile
                pl.BlockSpec((1, S, H), lambda b, qi: (b, 0, 0)),    # full x for K/V
                w_spec, b_spec,   # query
                w_spec, b_spec,   # key
                w_spec, b_spec,   # value
            ],
            out_specs=[
                pl.BlockSpec((1, tq, D), lambda b, qi: (b, qi, 0)),
                pl.BlockSpec((1, tq, S), lambda b, qi: (b, qi, 0)),
            ],
        ),
        compiler_params=pltpu.CompilerParams(
            dimension_semantics=("parallel", "parallel"),
            vmem_limit_bytes=48 * 1024 * 1024,
        ),
    )(x, x, wq, bq2, wk, bk2, wv, bv2)
    return out, probs


def _reference(x, wq, bq, wk, bk, wv, bv):
    q = x @ wq + bq
    k = x @ wk + bk
    v = x @ wv + bv
    d = q.shape[-1]
    scores = jnp.einsum("bsd,btd->bst", q, k) / math.sqrt(d)
    probs = jax.nn.softmax(scores, axis=-1)
    out = jnp.einsum("bst,btd->bsd", probs, v)
    return out, probs


if __name__ == "__main__":
    B, S, H, D = 2, 8, 32, 16
    dropout = 0.1  # unused at inference

    key = jax.random.PRNGKey(0)
    ks = jax.random.split(key, 7)
    x = jax.random.normal(ks[0], (B, S, H), dtype=jnp.float32)

    # Deterministic parameter init (uniform, like PyTorch Linear's default range).
    bound = 1.0 / math.sqrt(H)
    wq = jax.random.uniform(ks[1], (H, D), minval=-bound, maxval=bound, dtype=jnp.float32)
    wk = jax.random.uniform(ks[2], (H, D), minval=-bound, maxval=bound, dtype=jnp.float32)
    wv = jax.random.uniform(ks[3], (H, D), minval=-bound, maxval=bound, dtype=jnp.float32)
    bq = jax.random.uniform(ks[4], (D,), minval=-bound, maxval=bound, dtype=jnp.float32)
    bk = jax.random.uniform(ks[5], (D,), minval=-bound, maxval=bound, dtype=jnp.float32)
    bv = jax.random.uniform(ks[6], (D,), minval=-bound, maxval=bound, dtype=jnp.float32)

    out, probs = attention_head(x, wq, bq, wk, bk, wv, bv)
    jax.block_until_ready((out, probs))

    # Reference is pure f32; kernel uses bf16 MXU inputs with f32 accumulation,
    # so compare with a tolerance that covers bf16 rounding (~0.4% relative).
    out_ref, probs_ref = _reference(x, wq, bq, wk, bk, wv, bv)
    assert jnp.allclose(out, out_ref, atol=2e-2, rtol=2e-2), "output mismatch"
    assert jnp.allclose(probs, probs_ref, atol=2e-2, rtol=2e-2), "probs mismatch"
    assert jnp.allclose(jnp.sum(probs, axis=-1), 1.0, atol=1e-2), "probs rows must sum to 1"

    print("KERNEL_OK")
</pallas_src>

<mosaic_0001>
module attributes {stable_mosaic.version = 11 : i64} {
  func.func @_attention_head_kernel(%arg0: i32, %arg1: i32, %arg2: memref<1x8x32xf32, #tpu.memory_space<vmem>>, %arg3: memref<1x8x32xf32, #tpu.memory_space<vmem>>, %arg4: memref<32x16xf32, #tpu.memory_space<vmem>>, %arg5: memref<1x16xf32, #tpu.memory_space<vmem>>, %arg6: memref<32x16xf32, #tpu.memory_space<vmem>>, %arg7: memref<1x16xf32, #tpu.memory_space<vmem>>, %arg8: memref<32x16xf32, #tpu.memory_space<vmem>>, %arg9: memref<1x16xf32, #tpu.memory_space<vmem>>, %arg10: memref<1x8x16xf32, #tpu.memory_space<vmem>>, %arg11: memref<1x8x8xf32, #tpu.memory_space<vmem>>) attributes {dimension_semantics = [#tpu.dimension_semantics<parallel>, #tpu.dimension_semantics<parallel>], iteration_bounds = array<i64: 2, 1>, scalar_prefetch = 0 : i64, scratch_operands = 0 : i64, tpu.core_type = #tpu.core_type<tc>, window_params = [{transform_indices = @transform_0, window_bounds = array<i64: 1, 8, 32>}, {transform_indices = @transform_1, window_bounds = array<i64: 1, 8, 32>}, {pipeline_mode = #tpu.pipeline_mode<synchronous>, transform_indices = @transform_2, window_bounds = array<i64: 32, 16>}, {pipeline_mode = #tpu.pipeline_mode<synchronous>, transform_indices = @transform_3, window_bounds = array<i64: 1, 16>}, {pipeline_mode = #tpu.pipeline_mode<synchronous>, transform_indices = @transform_4, window_bounds = array<i64: 32, 16>}, {pipeline_mode = #tpu.pipeline_mode<synchronous>, transform_indices = @transform_5, window_bounds = array<i64: 1, 16>}, {pipeline_mode = #tpu.pipeline_mode<synchronous>, transform_indices = @transform_6, window_bounds = array<i64: 32, 16>}, {pipeline_mode = #tpu.pipeline_mode<synchronous>, transform_indices = @transform_7, window_bounds = array<i64: 1, 16>}, {transform_indices = @transform_8, window_bounds = array<i64: 1, 8, 16>}, {transform_indices = @transform_9, window_bounds = array<i64: 1, 8, 8>}]} {
    %c0 = arith.constant 0 : index
    %c0_0 = arith.constant 0 : index
    %c0_1 = arith.constant 0 : index
    %0 = vector.load %arg2[%c0, %c0_0, %c0_1] : memref<1x8x32xf32, #tpu.memory_space<vmem>>, vector<1x8x32xf32>
    %1 = vector.shape_cast %0 : vector<1x8x32xf32> to vector<8x32xf32>
    %2 = arith.truncf %1 : vector<8x32xf32> to vector<8x32xbf16>
    %c0_2 = arith.constant 0 : index
    %c0_3 = arith.constant 0 : index
    %c0_4 = arith.constant 0 : index
    %3 = vector.load %arg3[%c0_2, %c0_3, %c0_4] : memref<1x8x32xf32, #tpu.memory_space<vmem>>, vector<1x8x32xf32>
    %4 = vector.shape_cast %3 : vector<1x8x32xf32> to vector<8x32xf32>
    %5 = arith.truncf %4 : vector<8x32xf32> to vector<8x32xbf16>
    %c0_5 = arith.constant 0 : index
    %c0_6 = arith.constant 0 : index
    %6 = vector.load %arg4[%c0_5, %c0_6] : memref<32x16xf32, #tpu.memory_space<vmem>>, vector<32x16xf32>
    %7 = arith.truncf %6 : vector<32x16xf32> to vector<32x16xbf16>
    %c0_7 = arith.constant 0 : index
    %c0_8 = arith.constant 0 : index
    %8 = vector.load %arg6[%c0_7, %c0_8] : memref<32x16xf32, #tpu.memory_space<vmem>>, vector<32x16xf32>
    %9 = arith.truncf %8 : vector<32x16xf32> to vector<32x16xbf16>
    %c0_9 = arith.constant 0 : index
    %c0_10 = arith.constant 0 : index
    %10 = vector.load %arg8[%c0_9, %c0_10] : memref<32x16xf32, #tpu.memory_space<vmem>>, vector<32x16xf32>
    %11 = arith.truncf %10 : vector<32x16xf32> to vector<32x16xbf16>
    %cst = arith.constant dense<0.000000e+00> : vector<8x16xf32>
    %12 = tpu.matmul %2, %7, %cst {dimension_numbers = #tpu.dot_dimension_numbers<[1], [0], [0], [1], [0, 0, 1, 1], [], []>} : vector<8x32xbf16>, vector<32x16xbf16>, vector<8x16xf32> -> vector<8x16xf32>
    %c0_11 = arith.constant 0 : index
    %c0_12 = arith.constant 0 : index
    %13 = vector.load %arg5[%c0_11, %c0_12] : memref<1x16xf32, #tpu.memory_space<vmem>>, vector<1x16xf32>
    %14 = vector.shape_cast %13 : vector<1x16xf32> to vector<16xf32>
    %15 = vector.shape_cast %14 : vector<16xf32> to vector<1x16xf32>
    %16 = vector.broadcast %15 : vector<1x16xf32> to vector<8x16xf32>
    %17 = arith.addf %12, %16 : vector<8x16xf32>
    %cst_13 = arith.constant dense<0.000000e+00> : vector<8x16xf32>
    %18 = tpu.matmul %5, %9, %cst_13 {dimension_numbers = #tpu.dot_dimension_numbers<[1], [0], [0], [1], [0, 0, 1, 1], [], []>} : vector<8x32xbf16>, vector<32x16xbf16>, vector<8x16xf32> -> vector<8x16xf32>
    %c0_14 = arith.constant 0 : index
    %c0_15 = arith.constant 0 : index
    %19 = vector.load %arg7[%c0_14, %c0_15] : memref<1x16xf32, #tpu.memory_space<vmem>>, vector<1x16xf32>
    %20 = vector.shape_cast %19 : vector<1x16xf32> to vector<16xf32>
    %21 = vector.shape_cast %20 : vector<16xf32> to vector<1x16xf32>
    %22 = vector.broadcast %21 : vector<1x16xf32> to vector<8x16xf32>
    %23 = arith.addf %18, %22 : vector<8x16xf32>
    %cst_16 = arith.constant dense<0.000000e+00> : vector<8x16xf32>
    %24 = tpu.matmul %5, %11, %cst_16 {dimension_numbers = #tpu.dot_dimension_numbers<[1], [0], [0], [1], [0, 0, 1, 1], [], []>} : vector<8x32xbf16>, vector<32x16xbf16>, vector<8x16xf32> -> vector<8x16xf32>
    %c0_17 = arith.constant 0 : index
    %c0_18 = arith.constant 0 : index
    %25 = vector.load %arg9[%c0_17, %c0_18] : memref<1x16xf32, #tpu.memory_space<vmem>>, vector<1x16xf32>
    %26 = vector.shape_cast %25 : vector<1x16xf32> to vector<16xf32>
    %27 = vector.shape_cast %26 : vector<16xf32> to vector<1x16xf32>
    %28 = vector.broadcast %27 : vector<1x16xf32> to vector<8x16xf32>
    %29 = arith.addf %24, %28 : vector<8x16xf32>
    %cst_19 = arith.constant 2.500000e-01 : f32
    %30 = vector.broadcast %cst_19 : f32 to vector<8x16xf32>
    %31 = arith.mulf %17, %30 : vector<8x16xf32>
    %32 = arith.truncf %31 : vector<8x16xf32> to vector<8x16xbf16>
    %33 = arith.truncf %23 : vector<8x16xf32> to vector<8x16xbf16>
    %cst_20 = arith.constant dense<0.000000e+00> : vector<8x8xf32>
    %34 = tpu.matmul %32, %33, %cst_20 {dimension_numbers = #tpu.dot_dimension_numbers<[1], [1], [0], [0], [0, 0, 1, 0], [], []>} : vector<8x16xbf16>, vector<8x16xbf16>, vector<8x8xf32> -> vector<8x8xf32>
    %cst_21 = arith.constant dense<0xFF800000> : vector<8xf32>
    %35 = vector.multi_reduction <maximumf>, %34, %cst_21 [1] : vector<8x8xf32> to vector<8xf32>
    %36 = vector.shape_cast %35 : vector<8xf32> to vector<8x1xf32>
    %37 = vector.broadcast %36 : vector<8x1xf32> to vector<8x8xf32>
    %38 = arith.subf %34, %37 : vector<8x8xf32>
    %39 = math.exp %38 : vector<8x8xf32>
    %cst_22 = arith.constant dense<0.000000e+00> : vector<8xf32>
    %40 = vector.multi_reduction <add>, %39, %cst_22 [1] : vector<8x8xf32> to vector<8xf32>
    %41 = vector.shape_cast %40 : vector<8xf32> to vector<8x1xf32>
    %42 = tpu.reciprocal %41 {approx = true} : vector<8x1xf32> -> vector<8x1xf32>
    %43 = vector.broadcast %42 : vector<8x1xf32> to vector<8x8xf32>
    %44 = arith.mulf %39, %43 : vector<8x8xf32>
    %45 = arith.truncf %44 : vector<8x8xf32> to vector<8x8xbf16>
    %46 = arith.truncf %29 : vector<8x16xf32> to vector<8x16xbf16>
    %cst_23 = arith.constant dense<0.000000e+00> : vector<8x16xf32>
    %47 = tpu.matmul %45, %46, %cst_23 {dimension_numbers = #tpu.dot_dimension_numbers<[1], [0], [0], [1], [0, 0, 1, 1], [], []>} : vector<8x8xbf16>, vector<8x16xbf16>, vector<8x16xf32> -> vector<8x16xf32>
    %c0_24 = arith.constant 0 : index
    %c0_25 = arith.constant 0 : index
    %c0_26 = arith.constant 0 : index
    %48 = vector.load %arg10[%c0_24, %c0_25, %c0_26] : memref<1x8x16xf32, #tpu.memory_space<vmem>>, vector<1x8x16xf32>
    %49 = vector.shape_cast %48 : vector<1x8x16xf32> to vector<8x16xf32>
    %50 = vector.shape_cast %47 : vector<8x16xf32> to vector<1x8x16xf32>
    tpu.vector_store %arg10[%c0_24, %c0_25, %c0_26], %50 {strides = array<i32>} : memref<1x8x16xf32, #tpu.memory_space<vmem>>, vector<1x8x16xf32>,
    %c0_27 = arith.constant 0 : index
    %c0_28 = arith.constant 0 : index
    %c0_29 = arith.constant 0 : index
    %51 = vector.load %arg11[%c0_27, %c0_28, %c0_29] : memref<1x8x8xf32, #tpu.memory_space<vmem>>, vector<1x8x8xf32>
    %52 = vector.shape_cast %51 : vector<1x8x8xf32> to vector<8x8xf32>
    %53 = vector.shape_cast %44 : vector<8x8xf32> to vector<1x8x8xf32>
    tpu.vector_store %arg11[%c0_27, %c0_28, %c0_29], %53 {strides = array<i32>} : memref<1x8x8xf32, #tpu.memory_space<vmem>>, vector<1x8x8xf32>,
    return
  }
  func.func @transform_0(%arg0: i32, %arg1: i32) -> (i32, i32, i32) {
    %c0_i32 = arith.constant 0 : i32
    %c0_i32_0 = arith.constant 0 : i32
    return %arg0, %arg1, %c0_i32 : i32, i32, i32
  }
  func.func @transform_1(%arg0: i32, %arg1: i32) -> (i32, i32, i32) {
    %c0_i32 = arith.constant 0 : i32
    %c0_i32_0 = arith.constant 0 : i32
    %c0_i32_1 = arith.constant 0 : i32
    return %arg0, %c0_i32, %c0_i32_0 : i32, i32, i32
  }
  func.func @transform_2(%arg0: i32, %arg1: i32) -> (i32, i32) {
    %c0_i32 = arith.constant 0 : i32
    %c0_i32_0 = arith.constant 0 : i32
    %c0_i32_1 = arith.constant 0 : i32
    return %c0_i32, %c0_i32_0 : i32, i32
  }
  func.func @transform_3(%arg0: i32, %arg1: i32) -> (i32, i32) {
    %c0_i32 = arith.constant 0 : i32
    %c0_i32_0 = arith.constant 0 : i32
    %c0_i32_1 = arith.constant 0 : i32
    return %c0_i32, %c0_i32_0 : i32, i32
  }
  func.func @transform_4(%arg0: i32, %arg1: i32) -> (i32, i32) {
    %c0_i32 = arith.constant 0 : i32
    %c0_i32_0 = arith.constant 0 : i32
    %c0_i32_1 = arith.constant 0 : i32
    return %c0_i32, %c0_i32_0 : i32, i32
  }
  func.func @transform_5(%arg0: i32, %arg1: i32) -> (i32, i32) {
    %c0_i32 = arith.constant 0 : i32
    %c0_i32_0 = arith.constant 0 : i32
    %c0_i32_1 = arith.constant 0 : i32
    return %c0_i32, %c0_i32_0 : i32, i32
  }
  func.func @transform_6(%arg0: i32, %arg1: i32) -> (i32, i32) {
    %c0_i32 = arith.constant 0 : i32
    %c0_i32_0 = arith.constant 0 : i32
    %c0_i32_1 = arith.constant 0 : i32
    return %c0_i32, %c0_i32_0 : i32, i32
  }
  func.func @transform_7(%arg0: i32, %arg1: i32) -> (i32, i32) {
    %c0_i32 = arith.constant 0 : i32
    %c0_i32_0 = arith.constant 0 : i32
    %c0_i32_1 = arith.constant 0 : i32
    return %c0_i32, %c0_i32_0 : i32, i32
  }
  func.func @transform_8(%arg0: i32, %arg1: i32) -> (i32, i32, i32) {
    %c0_i32 = arith.constant 0 : i32
    %c0_i32_0 = arith.constant 0 : i32
    return %arg0, %arg1, %c0_i32 : i32, i32, i32
  }
  func.func @transform_9(%arg0: i32, %arg1: i32) -> (i32, i32, i32) {
    %c0_i32 = arith.constant 0 : i32
    %c0_i32_0 = arith.constant 0 : i32
    return %arg0, %arg1, %c0_i32 : i32, i32, i32
  }
}

</mosaic_0001>

<llo_original>
// kernel: tpu_custom_call.1
$region0: #{tpu_custom_call.1}
  #allocation0 [shape = 'u32[]', space=smem, size = 0x4, offset = 0x4, fixed_abs, tag = 'smem constant byte address 0x4 - core index']
  #allocation1 [shape = 'u32[144,128]{1,0:T(1,128)}', space=vmem, size = 0x12000, scoped, tag = 'internal scratch']
  %s0 = inlined_call_operand.vmem [shape: f32[2,8,32], index: 0, kind: input, shape index: {}]
  %s1 = inlined_call_operand.vmem [shape: f32[2,8,32], index: 1, kind: input, shape index: {}]
  %s2 = inlined_call_operand.vmem [shape: f32[32,16], index: 2, kind: input, shape index: {}]
  %s3 = inlined_call_operand.vmem [shape: f32[1,16], index: 3, kind: input, shape index: {}]
  %s4 = inlined_call_operand.vmem [shape: f32[32,16], index: 4, kind: input, shape index: {}]
  %s5 = inlined_call_operand.vmem [shape: f32[1,16], index: 5, kind: input, shape index: {}]
  %s6 = inlined_call_operand.vmem [shape: f32[32,16], index: 6, kind: input, shape index: {}]
  %s7 = inlined_call_operand.vmem [shape: f32[1,16], index: 7, kind: input, shape index: {}]
  %s8 = inlined_call_operand.hbm [shape: f32[2,8,16], index: 8, kind: output, shape index: {0}]
  %s9 = inlined_call_operand.hbm [shape: f32[2,8,8], index: 9, kind: output, shape index: {1}]
  %10 = xla_tuple %s8, %s9
  %s11 = sld [smem:[#allocation0]]
  $region73: #{tpu_custom_call.1} parent=0
    _
  %s13 = ssub.s32 1, %s11
  %s14 = scalar_select 0, %s13, %s11
  $region1: #{tpu_custom_call.1} parent=0
    #allocation2 [shape = 'u8[8192]{0}', space=vmem, size = 0x2000, scoped, tag = 'output window, operand 0']
    #allocation3 [shape = 's32[2]{0}', space=sflag, size = 0x8, scoped, tag = 'scoped memory for tpu_custom_call.1']
    #allocation4 [shape = 'u8[8192]{0}', space=vmem, size = 0x2000, scoped, tag = 'output window, operand 1']
    #allocation5 [shape = 's32[2]{0}', space=sflag, size = 0x8, scoped, tag = 'scoped memory for tpu_custom_call.1']
    %15 = vsyncpa [#allocation3], 0
    %s16 = scalar_lea.sflag [#allocation3], 1
    %17 = vsyncpa %s16, 0
    %18 = vsyncpa [#allocation5], 0
    %s19 = scalar_lea.sflag [#allocation5], 1
    %20 = vsyncpa %s19, 0
    loop: start=0, step=1, limit=4
    $region2: #{tpu_custom_call.1} parent=1 // loop_pre_header
      _
    $region3: #{tpu_custom_call.1} parent=1 // loop_header
      %s22 = sphi 0, %s26
      %p23 = scmp.ge.s32.totalorder %s22, 4
      %s29 = sphi 0, %s41
      %s30 = sphi 0, %s37
      %s31 = sphi 0, %s29
      %s32 = sphi 0, %s30
      %s33 = sphi 0, %s31
      %s34 = sphi 0, %s32
      %s46 = sphi 0, %s48
      %s49 = sphi 0, %s46
      %s50 = sphi 0, %s49
      %s66 = sphi 0, %s50
      %s72 = sphi 0, %s74
      %s75 = sphi 0, %s72
      %s76 = sphi 0, %s75
      %s92 = sphi 0, %s76
      %s96 = sphi 0, %s96
      %s98 = sphi 0, %s96
      %s99 = sphi 0, %s98
      %s113 = sphi 0, %s99
      %s117 = sphi 0, %s117
      %s119 = sphi 0, %s117
      %s120 = sphi 0, %s119
      %s134 = sphi 0, %s120
      %s138 = sphi 0, %s138
      %s140 = sphi 0, %s138
      %s141 = sphi 0, %s140
      %s155 = sphi 0, %s141
      %s159 = sphi 0, %s159
      %s161 = sphi 0, %s159
      %s162 = sphi 0, %s161
      %s176 = sphi 0, %s162
      %s180 = sphi 0, %s180
      %s182 = sphi 0, %s180
      %s183 = sphi 0, %s182
      %s197 = sphi 0, %s183
      %s201 = sphi 0, %s201
      %s203 = sphi 0, %s201
      %s204 = sphi 0, %s203
      %s218 = sphi 0, %s204
      %s226 = sphi 0, %s228
      %s229 = sphi 0, %s226
      %s230 = sphi 0, %s229
      %s246 = sphi 0, %s230
      %s254 = sphi 0, %s256
      %s257 = sphi 0, %s254
      %s258 = sphi 0, %s257
      %s274 = sphi 0, %s258
    $region4: #{tpu_custom_call.1} parent=1 // loop_header_branch
      %25 = sbr.rel (%p23) target = $region8
    $region5: #{tpu_custom_call.1} parent=1 // loop_body
      %s27 = ssub.s32 %s22, 1
      %s28 = ssub.s32 %s22, 2
      %s35 = sadd.s32 1, %s30
      %p36 = scmp.ge.s32.totalorder %s35, 1
      %s37 = scalar_select %p36, 0, %s35
      %s38 = sadd.s32 1, %s29
      %s39 = scalar_select %p36, %s38, %s29
      %p40 = scmp.ge.s32.totalorder %s39, 2
      %s41 = scalar_select %p40, 0, %s39
      %s42 = ssub.s32 %s29, %s41
      %s43 = ssub.s32 %s30, %s37
      %s44 = sor.u32 %s42, %s43
      %p45 = scmp.eq.s32.totalorder %s44, 0
      %s47 = sadd.s32 %s46, 1
      %s48 = scalar_select %p45, %s46, %s47
      %p51 = pneg %p45
      %p52 = scmp.eq.s32.totalorder %s22, 1
      %p53 = por %p51, %p52
      %p54 = scmp.ne.s32.totalorder %s46, %s49
      %p55 = scmp.eq.s32.totalorder %s22, 0
      %p56 = por %p54, %p55
      %p57 = scmp.ne.s32.totalorder %s46, %s49
      %p58 = scmp.eq.s32.totalorder %s27, 1
      %p59 = por %p57, %p58
      %p60 = scmp.ne.s32.totalorder %s49, %s50
      %p61 = scmp.eq.s32.totalorder %s27, 0
      %p62 = por %p60, %p61
      %p63 = scmp.ne.s32.totalorder %s49, %s50
      %p64 = scmp.eq.s32.totalorder %s28, 1
      %p65 = por %p63, %p64
      %p67 = scmp.ne.s32.totalorder %s50, %s66
      %p68 = scmp.eq.s32.totalorder %s28, 0
      %p69 = por %p67, %p68
      %s70 = ssub.s32 %s29, %s41
      %p71 = scmp.eq.s32.totalorder %s70, 0
      %s73 = sadd.s32 %s72, 1
      %s74 = scalar_select %p71, %s72, %s73
      %p77 = pneg %p71
      %p78 = scmp.eq.s32.totalorder %s22, 1
      %p79 = por %p77, %p78
      %p80 = scmp.ne.s32.totalorder %s72, %s75
      %p81 = scmp.eq.s32.totalorder %s22, 0
      %p82 = por %p80, %p81
      %p83 = scmp.ne.s32.totalorder %s72, %s75
      %p84 = scmp.eq.s32.totalorder %s27, 1
      %p85 = por %p83, %p84
      %p86 = scmp.ne.s32.totalorder %s75, %s76
      %p87 = scmp.eq.s32.totalorder %s27, 0
      %p88 = por %p86, %p87
      %p89 = scmp.ne.s32.totalorder %s75, %s76
      %p90 = scmp.eq.s32.totalorder %s28, 1
      %p91 = por %p89, %p90
      %p93 = scmp.ne.s32.totalorder %s76, %s92
      %p94 = scmp.eq.s32.totalorder %s28, 0
      %p95 = por %p93, %p94
      %s97 = sadd.s32 %s96, 1
      %p100 = scmp.eq.s32.totalorder %s22, 1
      %p101 = scmp.ne.s32.totalorder %s96, %s98
      %p102 = scmp.eq.s32.totalorder %s22, 0
      %p103 = por %p101, %p102
      %p104 = scmp.ne.s32.totalorder %s96, %s98
      %p105 = scmp.eq.s32.totalorder %s27, 1
      %p106 = por %p104, %p105
      %p107 = scmp.ne.s32.totalorder %s98, %s99
      %p108 = scmp.eq.s32.totalorder %s27, 0
      %p109 = por %p107, %p108
      %p110 = scmp.ne.s32.totalorder %s98, %s99
      %p111 = scmp.eq.s32.totalorder %s28, 1
      %p112 = por %p110, %p111
      %p114 = scmp.ne.s32.totalorder %s99, %s113
      %p115 = scmp.eq.s32.totalorder %s28, 0
      %p116 = por %p114, %p115
      %s118 = sadd.s32 %s117, 1
      %p121 = scmp.eq.s32.totalorder %s22, 1
      %p122 = scmp.ne.s32.totalorder %s117, %s119
      %p123 = scmp.eq.s32.totalorder %s22, 0
      %p124 = por %p122, %p123
      %p125 = scmp.ne.s32.totalorder %s117, %s119
      %p126 = scmp.eq.s32.totalorder %s27, 1
      %p127 = por %p125, %p126
      %p128 = scmp.ne.s32.totalorder %s119, %s120
      %p129 = scmp.eq.s32.totalorder %s27, 0
      %p130 = por %p128, %p129
      %p131 = scmp.ne.s32.totalorder %s119, %s120
      %p132 = scmp.eq.s32.totalorder %s28, 1
      %p133 = por %p131, %p132
      %p135 = scmp.ne.s32.totalorder %s120, %s134
      %p136 = scmp.eq.s32.totalorder %s28, 0
      %p137 = por %p135, %p136
      %s139 = sadd.s32 %s138, 1
      %p142 = scmp.eq.s32.totalorder %s22, 1
      %p143 = scmp.ne.s32.totalorder %s138, %s140
      %p144 = scmp.eq.s32.totalorder %s22, 0
      %p145 = por %p143, %p144
      %p146 = scmp.ne.s32.totalorder %s138, %s140
      %p147 = scmp.eq.s32.totalorder %s27, 1
      %p148 = por %p146, %p147
      %p149 = scmp.ne.s32.totalorder %s140, %s141
      %p150 = scmp.eq.s32.totalorder %s27, 0
      %p151 = por %p149, %p150
      %p152 = scmp.ne.s32.totalorder %s140, %s141
      %p153 = scmp.eq.s32.totalorder %s28, 1
      %p154 = por %p152, %p153
      %p156 = scmp.ne.s32.totalorder %s141, %s155
      %p157 = scmp.eq.s32.totalorder %s28, 0
      %p158 = por %p156, %p157
      %s160 = sadd.s32 %s159, 1
      %p163 = scmp.eq.s32.totalorder %s22, 1
      %p164 = scmp.ne.s32.totalorder %s159, %s161
      %p165 = scmp.eq.s32.totalorder %s22, 0
      %p166 = por %p164, %p165
      %p167 = scmp.ne.s32.totalorder %s159, %s161
      %p168 = scmp.eq.s32.totalorder %s27, 1
      %p169 = por %p167, %p168
      %p170 = scmp.ne.s32.totalorder %s161, %s162
      %p171 = scmp.eq.s32.totalorder %s27, 0
      %p172 = por %p170, %p171
      %p173 = scmp.ne.s32.totalorder %s161, %s162
      %p174 = scmp.eq.s32.totalorder %s28, 1
      %p175 = por %p173, %p174
      %p177 = scmp.ne.s32.totalorder %s162, %s176
      %p178 = scmp.eq.s32.totalorder %s28, 0
      %p179 = por %p177, %p178
      %s181 = sadd.s32 %s180, 1
      %p184 = scmp.eq.s32.totalorder %s22, 1
      %p185 = scmp.ne.s32.totalorder %s180, %s182
      %p186 = scmp.eq.s32.totalorder %s22, 0
      %p187 = por %p185, %p186
      %p188 = scmp.ne.s32.totalorder %s180, %s182
      %p189 = scmp.eq.s32.totalorder %s27, 1
      %p190 = por %p188, %p189
      %p191 = scmp.ne.s32.totalorder %s182, %s183
      %p192 = scmp.eq.s32.totalorder %s27, 0
      %p193 = por %p191, %p192
      %p194 = scmp.ne.s32.totalorder %s182, %s183
      %p195 = scmp.eq.s32.totalorder %s28, 1
      %p196 = por %p194, %p195
      %p198 = scmp.ne.s32.totalorder %s183, %s197
      %p199 = scmp.eq.s32.totalorder %s28, 0
      %p200 = por %p198, %p199
      %s202 = sadd.s32 %s201, 1
      %p205 = scmp.eq.s32.totalorder %s22, 1
      %p206 = scmp.ne.s32.totalorder %s201, %s203
      %p207 = scmp.eq.s32.totalorder %s22, 0
      %p208 = por %p206, %p207
      %p209 = scmp.ne.s32.totalorder %s201, %s203
      %p210 = scmp.eq.s32.totalorder %s27, 1
      %p211 = por %p209, %p210
      %p212 = scmp.ne.s32.totalorder %s203, %s204
      %p213 = scmp.eq.s32.totalorder %s27, 0
      %p214 = por %p212, %p213
      %p215 = scmp.ne.s32.totalorder %s203, %s204
      %p216 = scmp.eq.s32.totalorder %s28, 1
      %p217 = por %p215, %p216
      %p219 = scmp.ne.s32.totalorder %s204, %s218
      %p220 = scmp.eq.s32.totalorder %s28, 0
      %p221 = por %p219, %p220
      %s222 = ssub.s32 %s29, %s41
      %s223 = ssub.s32 %s30, %s37
      %s224 = sor.u32 %s222, %s223
      %p225 = scmp.eq.s32.totalorder %s224, 0
      %s227 = sadd.s32 %s226, 1
      %s228 = scalar_select %p225, %s226, %s227
      %p231 = pneg %p225
      %p232 = scmp.eq.s32.totalorder %s22, 1
      %p233 = por %p231, %p232
      %p234 = scmp.ne.s32.totalorder %s226, %s229
      %p235 = scmp.eq.s32.totalorder %s22, 0
      %p236 = por %p234, %p235
      %p237 = scmp.ne.s32.totalorder %s226, %s229
      %p238 = scmp.eq.s32.totalorder %s27, 1
      %p239 = por %p237, %p238
      %p240 = scmp.ne.s32.totalorder %s229, %s230
      %p241 = scmp.eq.s32.totalorder %s27, 0
      %p242 = por %p240, %p241
      %p243 = scmp.ne.s32.totalorder %s229, %s230
      %p244 = scmp.eq.s32.totalorder %s28, 1
      %p245 = por %p243, %p244
      %p247 = scmp.ne.s32.totalorder %s230, %s246
      %p248 = scmp.eq.s32.totalorder %s28, 0
      %p249 = por %p247, %p248
      %s250 = ssub.s32 %s29, %s41
      %s251 = ssub.s32 %s30, %s37
      %s252 = sor.u32 %s250, %s251
      %p253 = scmp.eq.s32.totalorder %s252, 0
      %s255 = sadd.s32 %s254, 1
      %s256 = scalar_select %p253, %s254, %s255
      %p259 = pneg %p253
      %p260 = scmp.eq.s32.totalorder %s22, 1
      %p261 = por %p259, %p260
      %p262 = scmp.ne.s32.totalorder %s254, %s257
      %p263 = scmp.eq.s32.totalorder %s22, 0
      %p264 = por %p262, %p263
      %p265 = scmp.ne.s32.totalorder %s254, %s257
      %p266 = scmp.eq.s32.totalorder %s27, 1
      %p267 = por %p265, %p266
      %p268 = scmp.ne.s32.totalorder %s257, %s258
      %p269 = scmp.eq.s32.totalorder %s27, 0
      %p270 = por %p268, %p269
      %p271 = scmp.ne.s32.totalorder %s257, %s258
      %p272 = scmp.eq.s32.totalorder %s28, 1
      %p273 = por %p271, %p272
      %p275 = scmp.ne.s32.totalorder %s258, %s274
      %p276 = scmp.eq.s32.totalorder %s28, 0
      %p277 = por %p275, %p276
      %p278 = scmp.le.s32.totalorder 1, %s22
      %p279 = scmp.lt.s32.totalorder %s22, 3
      %p280 = pnand %p278, %p279
      %p281 = pneg %p280
      // Predicated region
      $region9: #{tpu_custom_call.1} parent=5 // pred_check
        _
      $region10: #{tpu_custom_call.1} parent=5 // pred_check_branch
        %283 = sbr.rel (%p280) target = $region12
      $region11: #{tpu_custom_call.1} parent=5 // pred_region
        %s284 = ssub.s32 %s22, 1
        // Predicated region
        $region13: #{tpu_custom_call.1} parent=11 // pred_check
          %p285 = pneg %p109
        $region14: #{tpu_custom_call.1} parent=11 // pred_check_branch
          %287 = sbr.rel (%p285) target = $region16
        $region15: #{tpu_custom_call.1} parent=11 // pred_region
          _
        $region16: #{tpu_custom_call.1} parent=11 // pred_fallthru
          _
        // Predicated region
        $region17: #{tpu_custom_call.1} parent=11 // pred_check
          %p288 = pneg %p130
        $region18: #{tpu_custom_call.1} parent=11 // pred_check_branch
          %290 = sbr.rel (%p288) target = $region20
        $region19: #{tpu_custom_call.1} parent=11 // pred_region
          _
        $region20: #{tpu_custom_call.1} parent=11 // pred_fallthru
          _
        // Predicated region
        $region21: #{tpu_custom_call.1} parent=11 // pred_check
          %p291 = pneg %p151
        $region22: #{tpu_custom_call.1} parent=11 // pred_check_branch
          %293 = sbr.rel (%p291) target = $region24
        $region23: #{tpu_custom_call.1} parent=11 // pred_region
          _
        $region24: #{tpu_custom_call.1} parent=11 // pred_fallthru
          _
        // Predicated region
        $region25: #{tpu_custom_call.1} parent=11 // pred_check
          %p294 = pneg %p172
        $region26: #{tpu_custom_call.1} parent=11 // pred_check_branch
          %296 = sbr.rel (%p294) target = $region28
        $region27: #{tpu_custom_call.1} parent=11 // pred_region
          _
        $region28: #{tpu_custom_call.1} parent=11 // pred_fallthru
          _
        // Predicated region
        $region29: #{tpu_custom_call.1} parent=11 // pred_check
          %p297 = pneg %p193
        $region30: #{tpu_custom_call.1} parent=11 // pred_check_branch
          %299 = sbr.rel (%p297) target = $region32
        $region31: #{tpu_custom_call.1} parent=11 // pred_region
          _
        $region32: #{tpu_custom_call.1} parent=11 // pred_fallthru
          _
        // Predicated region
        $region33: #{tpu_custom_call.1} parent=11 // pred_check
          %p300 = pneg %p214
        $region34: #{tpu_custom_call.1} parent=11 // pred_check_branch
          %302 = sbr.rel (%p300) target = $region36
        $region35: #{tpu_custom_call.1} parent=11 // pred_region
          _
        $region36: #{tpu_custom_call.1} parent=11 // pred_fallthru
          _
      $region12: #{tpu_custom_call.1} parent=5 // pred_fallthru
        _
      %p303 = scmp.lt.s32.totalorder %s22, 2
      // Predicated region
      $region37: #{tpu_custom_call.1} parent=5 // pred_check
        %p304 = pneg %p303
      $region38: #{tpu_custom_call.1} parent=5 // pred_check_branch
        %306 = sbr.rel (%p304) target = $region40
      $region39: #{tpu_custom_call.1} parent=5 // pred_region
        // Predicated region
        $region41: #{tpu_custom_call.1} parent=39 // pred_check
          %p307 = pneg %p56
        $region42: #{tpu_custom_call.1} parent=39 // pred_check_branch
          %309 = sbr.rel (%p307) target = $region44
        $region43: #{tpu_custom_call.1} parent=39 // pred_region
          %p310 = scmp.lt.s32.totalorder %s29, 1
          %s311 = scalar_select %p310, %s29, 1
          %p312 = scmp.lt.s32.totalorder %s30, 0
          %s313 = scalar_select %p312, %s30, 0
          %s314 = sadd.s32 %s313, %s311
          %s315 = smul.addr %s314, 8
          %s316 = scalar_lea.vmem %s0, %s315
        $region44: #{tpu_custom_call.1} parent=39 // pred_fallthru
          _
        // Predicated region
        $region45: #{tpu_custom_call.1} parent=39 // pred_check
          %p317 = pneg %p82
        $region46: #{tpu_custom_call.1} parent=39 // pred_check_branch
          %319 = sbr.rel (%p317) target = $region48
        $region47: #{tpu_custom_call.1} parent=39 // pred_region
          %p320 = scmp.lt.s32.totalorder %s29, 1
          %s321 = scalar_select %p320, %s29, 1
          %s322 = smul.addr %s321, 8
          %s323 = scalar_lea.vmem %s1, %s322
        $region48: #{tpu_custom_call.1} parent=39 // pred_fallthru
          _
      $region40: #{tpu_custom_call.1} parent=5 // pred_fallthru
        _
      %p324 = scmp.le.s32.totalorder 1, %s22
      %p325 = scmp.lt.s32.totalorder %s22, 3
      %p326 = pnand %p324, %p325
      %p327 = pneg %p326
      // Predicated region
      $region49: #{tpu_custom_call.1} parent=5 // pred_check
        _
      $region50: #{tpu_custom_call.1} parent=5 // pred_check_branch
        %329 = sbr.rel (%p326) target = $region52
      $region51: #{tpu_custom_call.1} parent=5 // pred_region
        %s330 = ssub.s32 %s22, 1
        %p331 = scmp.lt.s32.totalorder %s31, 1
        %s332 = scalar_select %p331, %s31, 1
        %p333 = scmp.lt.s32.totalorder %s32, 0
        %s334 = scalar_select %p333, %s32, 0
        %s335 = sadd.s32 %s334, %s332
        %s336 = smul.addr %s335, 8
        %s337 = scalar_lea.vmem %s0, %s336
        %p338 = pneg %p62
        %p339 = pneg %p59
        %p340 = scmp.lt.s32.totalorder %s31, 1
        %s341 = scalar_select %p340, %s31, 1
        %s342 = smul.addr %s341, 8
        %s343 = scalar_lea.vmem %s1, %s342
        %p344 = pneg %p88
        %p345 = pneg %p85
        %p346 = pneg %p109
        %p347 = pneg %p106
        %p348 = pneg %p130
        %p349 = pneg %p127
        %p350 = pneg %p151
        %p351 = pneg %p148
        %p352 = pneg %p172
        %p353 = pneg %p169
        %p354 = pneg %p193
        %p355 = pneg %p190
        %p356 = pneg %p214
        %p357 = pneg %p211
        %p358 = pneg %p242
        %p359 = pneg %p239
        %s360 = sand.u32 %s229, 1
        %s361 = scalar_lea.sflag [#allocation3], %s360
        %s362 = sand.u32 %s229, 1
        %s363 = smul.addr %s362, 8
        %s364 = scalar_lea.vmem [#allocation2], %s363
        %p365 = pneg %p270
        %p366 = pneg %p267
        %s367 = sand.u32 %s257, 1
        %s368 = scalar_lea.sflag [#allocation5], %s367
        %s369 = sand.u32 %s257, 1
        %s370 = smul.addr %s369, 8
        %s371 = scalar_lea.vmem [#allocation4], %s370
        %p372 = scmp.lt.s32.totalorder %s31, 1
        %s373 = scalar_select %p372, %s31, 1
        %p374 = scmp.lt.s32.totalorder %s32, 0
        %s375 = scalar_select %p374, %s32, 0
        %s376 = sadd.s32 %s375, %s373
        %s377 = smul.addr %s376, 8
        %s378 = scalar_lea.vmem %s0, %s377
        %p379 = scmp.lt.s32.totalorder %s31, 1
        %s380 = scalar_select %p379, %s31, 1
        %s381 = smul.addr %s380, 8
        %s382 = scalar_lea.vmem %s1, %s381
        %v384 = vld [vmem:[%s378] sm:$0xff]
        %v385 = vpack.c.bf16 %v384, %v384
        %v386 = vld [vmem:[%s382] sm:$0xff]
        %v387 = vpack.c.bf16 %v386, %v386
        %v388 = vld [vmem:[%s2] sm:$0xff]
        %v389 = vld [vmem:[%s2 + $0x8] sm:$0xff]
        %v390 = vld [vmem:[%s2 + $0x10] sm:$0xff]
        %v391 = vld [vmem:[%s2 + $0x18] sm:$0xff]
        %v392 = vpack.c.bf16 %v389, %v388
        %v393 = vpack.c.bf16 %v391, %v390
        %v394 = vld [vmem:[%s4] sm:$0xff]
        %v395 = vld [vmem:[%s4 + $0x8] sm:$0xff]
        %v396 = vld [vmem:[%s4 + $0x10] sm:$0xff]
        %v397 = vld [vmem:[%s4 + $0x18] sm:$0xff]
        %v398 = vpack.c.bf16 %v395, %v394
        %v399 = vpack.c.bf16 %v397, %v396
        %v400 = vld [vmem:[%s6] sm:$0xff]
        %v401 = vld [vmem:[%s6 + $0x8] sm:$0xff]
        %v402 = vld [vmem:[%s6 + $0x10] sm:$0xff]
        %v403 = vld [vmem:[%s6 + $0x18] sm:$0xff]
        %v404 = vpack.c.bf16 %v401, %v400
        %v405 = vpack.c.bf16 %v403, %v402
        %v406 = vld [vmem:[%s3] sm:$0x1]
        %v408 = vlaneseq
        %v409 = vshrl.u32 %v408, 7
        %v410 = vsub.s32 0, %v409
        %v411 = vrot.slane %v406, %v410
        %vm413 = vcmask 261120
        %v415 = vsel %vm413, %v385, 0
        %417 = vmatprep.subr.bf16.mxu0 0
        %418 = vmatpush1.bf16.msra.mxu0 0
        %419 = vmatprep.subr.bf16.mxu0 0
        %420 = vmatpush1.bf16.msra.mxu0 0
        %421 = vmatprep.subr.bf16.mxu0 0
        %422 = vmatpush1.bf16.msra.mxu0 0
        %423 = vmatprep.subr.bf16.mxu0 0
        %424 = vmatpush1.bf16.msra.mxu0 0
        %425 = vmatprep.subr.bf16.mxu0 0
        %426 = vmatpush1.bf16.msra.mxu0 0
        %427 = vmatprep.subr.bf16.mxu0 0
        %428 = vmatpush1.bf16.msra.mxu0 0
        %429 = vmatprep.subr.bf16.mxu0 0
        %430 = vmatpush1.bf16.msra.mxu0 %v393
        %431 = vmatprep.subr.bf16.mxu0 0
        %432 = vmatpush1.bf16.msra.mxu0 %v392
        %433 = vmatprep.subr.bf16.mxu0 0
        %434 = vmatpush2.bf16.msra.mxu0 0
        %435 = vmatprep.subr.bf16.mxu0 0
        %436 = vmatpush2.bf16.msra.mxu0 0
        %437 = vmatprep.subr.bf16.mxu0 0
        %438 = vmatpush2.bf16.msra.mxu0 0
        %439 = vmatprep.subr.bf16.mxu0 0
        %440 = vmatpush2.bf16.msra.mxu0 0
        %441 = vmatprep.subr.bf16.mxu0 0
        %442 = vmatpush2.bf16.msra.mxu0 0
        %443 = vmatprep.subr.bf16.mxu0 0
        %444 = vmatpush2.bf16.msra.mxu0 0
        %445 = vmatprep.subr.bf16.mxu0 0
        %446 = vmatpush2.bf16.msra.mxu0 0
        %447 = vmatprep.subr.bf16.mxu0 0
        %448 = vmatpush2.bf16.msra.mxu0 0
        %449 = vmatprep.mubr.bf16.mxu0 0
        %450 = vmatmul.mubr.bf16.gmra.mxu0 %v415
        %v451 = vpop.f32.mrf.mxu0
        %v452 = vadd.f32 %v411, %v451
        %v453 = vpop.f32.mrf.mxu0
        %v454 = vpop.f32.mrf.mxu0
        %v455 = vpop.f32.mrf.mxu0
        %456 = vdwg.mxu0
        %v457 = vld [vmem:[%s5] sm:$0x1]
        %v459 = vlaneseq
        %v460 = vshrl.u32 %v459, 7
        %v461 = vsub.s32 0, %v460
        %v462 = vrot.slane %v457, %v461
        %v465 = vsel %vm413, %v387, 0
        %467 = vmatprep.subr.bf16.mxu0 0
        %468 = vmatpush1.bf16.msra.mxu0 0
        %469 = vmatprep.subr.bf16.mxu0 0
        %470 = vmatpush1.bf16.msra.mxu0 0
        %471 = vmatprep.subr.bf16.mxu0 0
        %472 = vmatpush1.bf16.msra.mxu0 0
        %473 = vmatprep.subr.bf16.mxu0 0
        %474 = vmatpush1.bf16.msra.mxu0 0
        %475 = vmatprep.subr.bf16.mxu0 0
        %476 = vmatpush1.bf16.msra.mxu0 0
        %477 = vmatprep.subr.bf16.mxu0 0
        %478 = vmatpush1.bf16.msra.mxu0 0
        %479 = vmatprep.subr.bf16.mxu0 0
        %480 = vmatpush1.bf16.msra.mxu0 %v399
        %481 = vmatprep.subr.bf16.mxu0 0
        %482 = vmatpush1.bf16.msra.mxu0 %v398
        %483 = vmatprep.subr.bf16.mxu0 0
        %484 = vmatpush2.bf16.msra.mxu0 0
        %485 = vmatprep.subr.bf16.mxu0 0
        %486 = vmatpush2.bf16.msra.mxu0 0
        %487 = vmatprep.subr.bf16.mxu0 0
        %488 = vmatpush2.bf16.msra.mxu0 0
        %489 = vmatprep.subr.bf16.mxu0 0
        %490 = vmatpush2.bf16.msra.mxu0 0
        %491 = vmatprep.subr.bf16.mxu0 0
        %492 = vmatpush2.bf16.msra.mxu0 0
        %493 = vmatprep.subr.bf16.mxu0 0
        %494 = vmatpush2.bf16.msra.mxu0 0
        %495 = vmatprep.subr.bf16.mxu0 0
        %496 = vmatpush2.bf16.msra.mxu0 0
        %497 = vmatprep.subr.bf16.mxu0 0
        %498 = vmatpush2.bf16.msra.mxu0 0
        %499 = vmatprep.mubr.bf16.mxu0 0
        %500 = vmatmul.mubr.bf16.gmra.mxu0 %v465
        %v501 = vpop.f32.mrf.mxu0
        %v502 = vadd.f32 %v462, %v501
        %v503 = vpop.f32.mrf.mxu0
        %v504 = vpop.f32.mrf.mxu0
        %v505 = vpop.f32.mrf.mxu0
        %506 = vdwg.mxu0
        %v507 = vld [vmem:[%s7] sm:$0x1]
        %v509 = vlaneseq
        %v510 = vshrl.u32 %v509, 7
        %v511 = vsub.s32 0, %v510
        %v512 = vrot.slane %v507, %v511
        %514 = vmatprep.subr.bf16.mxu0 0
        %515 = vmatpush1.bf16.msra.mxu0 0
        %516 = vmatprep.subr.bf16.mxu0 0
        %517 = vmatpush1.bf16.msra.mxu0 0
        %518 = vmatprep.subr.bf16.mxu0 0
        %519 = vmatpush1.bf16.msra.mxu0 0
        %520 = vmatprep.subr.bf16.mxu0 0
        %521 = vmatpush1.bf16.msra.mxu0 0
        %522 = vmatprep.subr.bf16.mxu0 0
        %523 = vmatpush1.bf16.msra.mxu0 0
        %524 = vmatprep.subr.bf16.mxu0 0
        %525 = vmatpush1.bf16.msra.mxu0 0
        %526 = vmatprep.subr.bf16.mxu0 0
        %527 = vmatpush1.bf16.msra.mxu0 %v405
        %528 = vmatprep.subr.bf16.mxu0 0
        %529 = vmatpush1.bf16.msra.mxu0 %v404
        %530 = vmatprep.subr.bf16.mxu0 0
        %531 = vmatpush2.bf16.msra.mxu0 0
        %532 = vmatprep.subr.bf16.mxu0 0
        %533 = vmatpush2.bf16.msra.mxu0 0
        %534 = vmatprep.subr.bf16.mxu0 0
        %535 = vmatpush2.bf16.msra.mxu0 0
        %536 = vmatprep.subr.bf16.mxu0 0
        %537 = vmatpush2.bf16.msra.mxu0 0
        %538 = vmatprep.subr.bf16.mxu0 0
        %539 = vmatpush2.bf16.msra.mxu0 0
        %540 = vmatprep.subr.bf16.mxu0 0
        %541 = vmatpush2.bf16.msra.mxu0 0
        %542 = vmatprep.subr.bf16.mxu0 0
        %543 = vmatpush2.bf16.msra.mxu0 0
        %544 = vmatprep.subr.bf16.mxu0 0
        %545 = vmatpush2.bf16.msra.mxu0 0
        %546 = vmatprep.mubr.bf16.mxu0 0
        %547 = vmatmul.mubr.bf16.gmra.mxu0 %v465
        %v548 = vpop.f32.mrf.mxu0
        %v549 = vadd.f32 %v512, %v548
        %v550 = vpop.f32.mrf.mxu0
        %v551 = vpop.f32.mrf.mxu0
        %v552 = vpop.f32.mrf.mxu0
        %553 = vdwg.mxu0
        %v554 = vmul.f32 %v452, 0.25
        %v555 = vpack.c.bf16 %v554, %v554
        %v556 = vpack.c.bf16 %v502, %v502
        %vm557 = vcmask 130048
        %v559 = vsel %vm557, %v555, 0
        %v562 = vsel %vm557, %v556, 0
        %564 = vmatprep.subr.bf16.mxu0 0
        %565 = vmatpush1.bf16.xpose.msra.mxu0 0
        %566 = vmatprep.subr.bf16.mxu0 0
        %567 = vmatpush1.bf16.xpose.msra.mxu0 0
        %568 = vmatprep.subr.bf16.mxu0 0
        %569 = vmatpush1.bf16.xpose.msra.mxu0 0
        %570 = vmatprep.subr.bf16.mxu0 0
        %571 = vmatpush1.bf16.xpose.msra.mxu0 0
        %572 = vmatprep.subr.bf16.mxu0 0
        %573 = vmatpush1.bf16.xpose.msra.mxu0 0
        %574 = vmatprep.subr.bf16.mxu0 0
        %575 = vmatpush1.bf16.xpose.msra.mxu0 0
        %576 = vmatprep.subr.bf16.mxu0 0
        %577 = vmatpush1.bf16.xpose.msra.mxu0 0
        %578 = vmatprep.subr.bf16.mxu0 0
        %579 = vmatpush1.bf16.xpose.msra.mxu0 %v562
        %580 = vmatprep.subr.bf16.mxu0 0
        %581 = vmatpush2.bf16.xpose.msra.mxu0 0
        %582 = vmatprep.subr.bf16.mxu0 0
        %583 = vmatpush2.bf16.xpose.msra.mxu0 0
        %584 = vmatprep.subr.bf16.mxu0 0
        %585 = vmatpush2.bf16.xpose.msra.mxu0 0
        %586 = vmatprep.subr.bf16.mxu0 0
        %587 = vmatpush2.bf16.xpose.msra.mxu0 0
        %588 = vmatprep.subr.bf16.mxu0 0
        %589 = vmatpush2.bf16.xpose.msra.mxu0 0
        %590 = vmatprep.subr.bf16.mxu0 0
        %591 = vmatpush2.bf16.xpose.msra.mxu0 0
        %592 = vmatprep.subr.bf16.mxu0 0
        %593 = vmatpush2.bf16.xpose.msra.mxu0 0
        %594 = vmatprep.subr.bf16.mxu0 0
        %595 = vmatpush2.bf16.xpose.msra.mxu0 0
        %596 = vmatprep.mubr.bf16.mxu0 0
        %597 = vmatmul.mubr.bf16.gmra.mxu0 %v559
        %v598 = vpop.f32.mrf.mxu0
        %v599 = vadd.f32 0.0, %v598
        %v600 = vpop.f32.mrf.mxu0
        %v601 = vpop.f32.mrf.mxu0
        %v602 = vpop.f32.mrf.mxu0
        %603 = vdwg.mxu0
        %vm604 = vcmask 64512
        %v605 = vsel %vm604, %v599, -inf
        %606 = vmax.xlane.f32.xlu0 %v605
        %v607 = vpop.xlane.xlu0 %606
        %v608 = vsub.f32 %v599, %v607
        %v609 = vmul.f32 %v608, 1.442695
        %v610 = vpow.pop %v609
        %v611 = vsel %vm604, %v610, 0.0
        %612 = vadd.xlane.f32.xlu0 %v611
        %v613 = vpop.xlane.xlu0 %612
        %v614 = vrcp.pop %v613
        %v615 = vmul.f32 %v610, %v614
        %v616 = vpack.c.bf16 %v615, %v615
        %v617 = vpack.c.bf16 %v549, %v549
        %v619 = vsel %vm604, %v616, 0
        %vm621 = vcmask 1043456
        %v623 = vsel %vm621, %v617, 0
        %625 = vmatprep.subr.bf16.mxu0 0
        %626 = vmatpush1.bf16.msra.mxu0 0
        %627 = vmatprep.subr.bf16.mxu0 0
        %628 = vmatpush1.bf16.msra.mxu0 0
        %629 = vmatprep.subr.bf16.mxu0 0
        %630 = vmatpush1.bf16.msra.mxu0 0
        %631 = vmatprep.subr.bf16.mxu0 0
        %632 = vmatpush1.bf16.msra.mxu0 0
        %633 = vmatprep.subr.bf16.mxu0 0
        %634 = vmatpush1.bf16.msra.mxu0 0
        %635 = vmatprep.subr.bf16.mxu0 0
        %636 = vmatpush1.bf16.msra.mxu0 0
        %637 = vmatprep.subr.bf16.mxu0 0
        %638 = vmatpush1.bf16.msra.mxu0 0
        %639 = vmatprep.subr.bf16.mxu0 0
        %640 = vmatpush1.bf16.msra.mxu0 %v623
        %641 = vmatprep.subr.bf16.mxu0 0
        %642 = vmatpush2.bf16.msra.mxu0 0
        %643 = vmatprep.subr.bf16.mxu0 0
        %644 = vmatpush2.bf16.msra.mxu0 0
        %645 = vmatprep.subr.bf16.mxu0 0
        %646 = vmatpush2.bf16.msra.mxu0 0
        %647 = vmatprep.subr.bf16.mxu0 0
        %648 = vmatpush2.bf16.msra.mxu0 0
        %649 = vmatprep.subr.bf16.mxu0 0
        %650 = vmatpush2.bf16.msra.mxu0 0
        %651 = vmatprep.subr.bf16.mxu0 0
        %652 = vmatpush2.bf16.msra.mxu0 0
        %653 = vmatprep.subr.bf16.mxu0 0
        %654 = vmatpush2.bf16.msra.mxu0 0
        %655 = vmatprep.subr.bf16.mxu0 0
        %656 = vmatpush2.bf16.msra.mxu0 0
        %657 = vmatprep.mubr.bf16.mxu0 0
        %658 = vmatmul.mubr.bf16.gmra.mxu0 %v619
        %v659 = vpop.f32.mrf.mxu0
        %v660 = vadd.f32 0.0, %v659
        %v661 = vpop.f32.mrf.mxu0
        %v662 = vpop.f32.mrf.mxu0
        %v663 = vpop.f32.mrf.mxu0
        %664 = vdwg.mxu0
        %665 = vst.msk [vmem:[%s364] sm:$0xff] %vm557, %v660
        %666 = vst.msk [vmem:[%s371] sm:$0xff] %vm604, %v615
        %s667 = sand.u32 %s229, 1
        %s668 = scalar_lea.sflag [#allocation3], %s667
        %s669 = sand.u32 %s229, 1
        %s670 = smul.addr %s669, 8
        %s671 = scalar_lea.vmem [#allocation2], %s670
        %s672 = sand.u32 %s257, 1
        %s673 = scalar_lea.sflag [#allocation5], %s672
        %s674 = sand.u32 %s257, 1
        %s675 = smul.addr %s674, 8
        %s676 = scalar_lea.vmem [#allocation4], %s675
        // Predicated region
        $region53: #{tpu_custom_call.1} parent=51 // pred_check
          %p677 = pneg %p239
        $region54: #{tpu_custom_call.1} parent=51 // pred_check_branch
          %679 = sbr.rel (%p677) target = $region56
        $region55: #{tpu_custom_call.1} parent=51 // pred_region
          %s681 = ssub.s32 128, 128
          %682 = vsyncadd %s668, %s681
          %s683 = sadd.s32 %s32, %s31
          %s684 = smul.addr %s683, 128
          %s685 = scalar_lea.hbm %s8, %s684
          %s687 = sshll.u32 %s671, 4
          %s688 = int_to_ptr.vmem [resolvable:$true] %s687
          %690 = dma.vmem_to_hbm [thread:$0]  %s688, 128, %s685, %s668
        $region56: #{tpu_custom_call.1} parent=51 // pred_fallthru
          _
        // Predicated region
        $region57: #{tpu_custom_call.1} parent=51 // pred_check
          %p691 = pneg %p267
        $region58: #{tpu_custom_call.1} parent=51 // pred_check_branch
          %693 = sbr.rel (%p691) target = $region60
        $region59: #{tpu_custom_call.1} parent=51 // pred_region
          %s695 = ssub.s32 128, 128
          %696 = vsyncadd %s673, %s695
          %s697 = sadd.s32 %s32, %s31
          %s698 = smul.addr %s697, 128
          %s699 = scalar_lea.hbm %s9, %s698
          %s701 = sshll.u32 %s676, 4
          %s702 = int_to_ptr.vmem [resolvable:$true] %s701
          %704 = dma.vmem_to_hbm [thread:$0]  %s702, 128, %s699, %s673
        $region60: #{tpu_custom_call.1} parent=51 // pred_fallthru
          _
      $region52: #{tpu_custom_call.1} parent=5 // pred_fallthru
        _
      %p705 = scmp.le.s32.totalorder 2, %s22
      // Predicated region
      $region61: #{tpu_custom_call.1} parent=5 // pred_check
        %p706 = pneg %p705
      $region62: #{tpu_custom_call.1} parent=5 // pred_check_branch
        %708 = sbr.rel (%p706) target = $region64
      $region63: #{tpu_custom_call.1} parent=5 // pred_region
        %s709 = ssub.s32 %s22, 2
        // Predicated region
        $region65: #{tpu_custom_call.1} parent=63 // pred_check
          %p710 = pneg %p245
        $region66: #{tpu_custom_call.1} parent=63 // pred_check_branch
          %712 = sbr.rel (%p710) target = $region68
        $region67: #{tpu_custom_call.1} parent=63 // pred_region
          %s713 = sand.u32 %s230, 1
          %s714 = scalar_lea.sflag [#allocation3], %s713
          %s715 = sand.u32 %s230, 1
          %s716 = smul.addr %s715, 8
          %s717 = scalar_lea.vmem [#allocation2], %s716
          %718 = dma.done %s714, 128
        $region68: #{tpu_custom_call.1} parent=63 // pred_fallthru
          _
        // Predicated region
        $region69: #{tpu_custom_call.1} parent=63 // pred_check
          %p719 = pneg %p273
        $region70: #{tpu_custom_call.1} parent=63 // pred_check_branch
          %721 = sbr.rel (%p719) target = $region72
        $region71: #{tpu_custom_call.1} parent=63 // pred_region
          %s722 = sand.u32 %s258, 1
          %s723 = scalar_lea.sflag [#allocation5], %s722
          %s724 = sand.u32 %s258, 1
          %s725 = smul.addr %s724, 8
          %s726 = scalar_lea.vmem [#allocation4], %s725
          %727 = dma.done %s723, 128
        $region72: #{tpu_custom_call.1} parent=63 // pred_fallthru
          _
      $region64: #{tpu_custom_call.1} parent=5 // pred_fallthru
        _
    $region6: #{tpu_custom_call.1} parent=1 // loop_footer
      %s26 = sadd.s32 1, %s22
    $region7: #{tpu_custom_call.1} parent=1 // loop_footer_branch
      %21 = sbr.rel target = $region3
    $region8: #{tpu_custom_call.1} parent=1 // loop_exit
      _
    %728 = vsyncpa [#allocation3], 1
    %s729 = scalar_lea.sflag [#allocation3], 1
    %730 = vsyncpa %s729, 1
    %731 = vsyncpa [#allocation5], 1
    %s732 = scalar_lea.sflag [#allocation5], 1
    %733 = vsyncpa %s732, 1

</llo_original>
